<compile_context>
chip_gen: v5e
topology: v5e:2x2
jax: 0.10.0
libtpu: 0.0.40
codegen_flags: <defaults>
</compile_context>

<pallas_src>
import jax
import jax.numpy as jnp
from jax.experimental import pallas as pl
from jax.experimental.pallas import tpu as pltpu

NORM_EPS = 1e-8  # _norm_no_nan eps


def _round_up(a, m):
    return ((a + m - 1) // m) * m


def _gvp_kernel(s_ref, v_ref, whT_ref, ws_sT_ref, ws_vT_ref, ws_b_ref,
                wvT_ref, sum3_ref, wsvT_ref, wsv_b_ref, s_out_ref, v_out_ref):
    s = s_ref[...].astype(jnp.float32)          # (tn, si)
    v = v_ref[...].astype(jnp.float32)          # (tn, 3*vi) native interleaved (f, xyz)

    # Single block-diagonal matmul replaces 3 per-component matmuls; columns come
    # out component-major: column c*h + k holds vh[n, c, k].
    vh = jnp.dot(v, whT_ref[...], preferred_element_type=jnp.float32)        # (tn, 3h)

    # _norm_no_nan over the spatial axis: reduce the 3 h-wide groups with a
    # stacked-identity matmul (MXU is idle; avoids sub-vreg lane slicing).
    # Clamp BEFORE sqrt, matching the reference.
    vn_sq = jnp.dot(vh * vh, sum3_ref[...], preferred_element_type=jnp.float32)  # (tn, h)
    vn = jnp.sqrt(jnp.maximum(vn_sq, NORM_EPS))

    # ws(concat([s, vn], -1)) + bias, split into two matmuls (no in-kernel concat).
    s_mid = (jnp.dot(s, ws_sT_ref[...], preferred_element_type=jnp.float32)
             + jnp.dot(vn, ws_vT_ref[...], preferred_element_type=jnp.float32)
             + ws_b_ref[...])                                                 # (tn, so)

    # Vector gate sigmoid(wsv(sigmoid(s_mid))).  wsv^T / wsv_b columns are
    # replicated 3x in the wrapper, so the gate arrives already broadcast to the
    # interleaved (vo, 3) output layout — no in-kernel lane broadcast needed.
    gate = jax.nn.sigmoid(
        jnp.dot(jax.nn.sigmoid(s_mid), wsvT_ref[...],
                preferred_element_type=jnp.float32)
        + wsv_b_ref[...])                                                     # (tn, 3*vo)

    # Scalar output: relu.
    s_out_ref[...] = jnp.maximum(s_mid, 0.0).astype(s_out_ref.dtype)

    # wv^T columns are permuted so this lands directly in (vo, 3)-interleaved
    # order: one straight lane-dense store; the wrapper reshape is free.
    v_out = jnp.dot(vh, wvT_ref[...], preferred_element_type=jnp.float32) * gate
    v_out_ref[...] = v_out.astype(v_out_ref.dtype)


def gvp_forward(s, v, wh_w, ws_w, ws_b, wv_w, wsv_w, wsv_b, *,
                tile_n=4096, min_grid_steps=2):
    """Pallas GVP forward.

    s: (N, si), v: (N, vi, 3)
    wh_w: (h, vi), ws_w: (so, si + h), ws_b: (so,)
    wv_w: (vo, h), wsv_w: (vo, so), wsv_b: (vo,)
    Returns (s_out (N, so), v_out (N, vo, 3)).
    """
    N, si = s.shape
    Nv, vi, three = v.shape
    assert three == 3 and Nv == N
    h = wh_w.shape[0]
    so = ws_w.shape[0]
    vo = wv_w.shape[0]
    assert ws_w.shape[1] == si + h
    assert wsv_w.shape == (vo, so)

    f32 = jnp.float32

    # v stays in its native (N, vi, 3) order: the reshape is a free view; the
    # (vi,3)<->(3,vi) permutation is folded into whT_blk's rows below.
    v_flat = v.reshape(N, 3 * vi)

    # Row tile: as large as tile_n (amortizes the ~0.35us/step pipeline overhead),
    # capped so the grid has >= min_grid_steps steps (both v7x TensorCores get
    # work), rounded to the dtype-aware sublane multiple (8 for f32, 16 bf16, ...).
    align = max(32 // jnp.dtype(s.dtype).itemsize,
                32 // jnp.dtype(v.dtype).itemsize, 8)
    cap = max(align, _round_up(pl.cdiv(N, min_grid_steps), align))
    tile = max(align, (min(int(tile_n), cap) // align) * align)
    grid = (pl.cdiv(N, tile),)   # ragged last block handled by Pallas (no pad/slice)

    # ---- one-time weight prep (all resident blocks via constant index_maps) ----
    eye3 = jnp.eye(3, dtype=f32)
    whT = wh_w.T.astype(f32)                                  # (vi, h)
    wvT = wv_w.T.astype(f32)                                  # (h, vo)
    # Block-diagonal wh^T: rows accept v in native (f, xyz)-interleaved order,
    # columns emit vh component-major (c*h + k).
    whT_blk = jnp.einsum('fk,cd->fcdk', whT, eye3).reshape(3 * vi, 3 * h)
    # Block-diagonal wv^T: rows are component-major, columns emit v_out in
    # (o, xyz)-interleaved order (so the output reshape to (N, vo, 3) is free).
    wvT_blk = jnp.einsum('cd,kv->ckvd', eye3, wvT).reshape(3 * h, 3 * vo)
    # Stacked identity: sums vh^2 over the 3 spatial components per channel k.
    sum3 = jnp.tile(jnp.eye(h, dtype=f32), (3, 1))            # (3h, h)
    ws_sT = ws_w[:, :si].T.astype(f32)                        # (si, so) scalar part
    ws_vT = ws_w[:, si:].T.astype(f32)                        # (h, so)  vector-norm part
    ws_b2 = ws_b.astype(f32).reshape(1, so)
    # Gate weights with columns replicated 3x -> gate comes out pre-broadcast.
    wsvT_blk = jnp.repeat(wsv_w.T.astype(f32), 3, axis=1)     # (so, 3*vo)
    wsv_b_blk = jnp.repeat(wsv_b.astype(f32), 3).reshape(1, 3 * vo)

    const = lambda i: (0, 0)
    out_shapes = (
        jax.ShapeDtypeStruct((N, so), s.dtype),
        jax.ShapeDtypeStruct((N, 3 * vo), v.dtype),
    )

    s_out, v_out_flat = pl.pallas_call(
        _gvp_kernel,
        out_shape=out_shapes,
        grid_spec=pltpu.PrefetchScalarGridSpec(
            num_scalar_prefetch=0,
            grid=grid,
            in_specs=[
                pl.BlockSpec((tile, si), lambda i: (i, 0)),        # s
                pl.BlockSpec((tile, 3 * vi), lambda i: (i, 0)),    # v (lane-dense)
                pl.BlockSpec((3 * vi, 3 * h), const),              # block-diag wh^T
                pl.BlockSpec((si, so), const),                     # ws^T (scalar part)
                pl.BlockSpec((h, so), const),                      # ws^T (vector-norm part)
                pl.BlockSpec((1, so), const),                      # ws bias
                pl.BlockSpec((3 * h, 3 * vo), const),              # block-diag wv^T
                pl.BlockSpec((3 * h, h), const),                   # spatial-sum reducer
                pl.BlockSpec((so, 3 * vo), const),                 # wsv^T (3x replicated)
                pl.BlockSpec((1, 3 * vo), const),                  # wsv bias (3x replicated)
            ],
            out_specs=[
                pl.BlockSpec((tile, so), lambda i: (i, 0)),
                pl.BlockSpec((tile, 3 * vo), lambda i: (i, 0)),
            ],
        ),
        compiler_params=pltpu.CompilerParams(
            dimension_semantics=("parallel",)),
    )(s, v_flat, whT_blk, ws_sT, ws_vT, ws_b2, wvT_blk, sum3,
      wsvT_blk, wsv_b_blk)

    return s_out, v_out_flat.reshape(N, vo, 3)


def _reference(s, v, wh_w, ws_w, ws_b, wv_w, wsv_w, wsv_b, precision=None):
    """Pure-JAX mirror of GVP.forward (vi>0, vo>0, vector_gate=True, (relu, sigmoid))."""
    vt = jnp.swapaxes(v, -1, -2)                                         # (N, 3, vi)
    vh = jnp.matmul(vt, wh_w.T, precision=precision)                     # (N, 3, h)
    vn = jnp.sqrt(jnp.maximum(jnp.sum(vh * vh, axis=-2), NORM_EPS))      # (N, h)
    s_mid = jnp.matmul(jnp.concatenate([s, vn], axis=-1), ws_w.T,
                       precision=precision) + ws_b                       # (N, so)
    vout = jnp.swapaxes(jnp.matmul(vh, wv_w.T, precision=precision), -1, -2)  # (N, vo, 3)
    gate = jnp.matmul(jax.nn.sigmoid(s_mid), wsv_w.T, precision=precision) + wsv_b
    vout = vout * jax.nn.sigmoid(gate)[..., None]
    return jax.nn.relu(s_mid), vout


if __name__ == "__main__":
    # in_dims = (si, vi), out_dims = (so, vo), h_dim = h.  N is deliberately NOT a
    # multiple of the chosen tile so the unpadded ragged-last-block path runs.
    N, si, vi, so, vo, h = 20, 32, 8, 32, 8, 16

    key = jax.random.PRNGKey(0)
    ks, kv, k1, k2, k3, k4, k5, k6 = jax.random.split(key, 8)

    s = jax.random.normal(ks, (N, si), dtype=jnp.float32)
    v = jax.random.normal(kv, (N, vi, 3), dtype=jnp.float32)

    wh_w = jax.random.normal(k1, (h, vi), dtype=jnp.float32) / jnp.sqrt(vi)
    ws_w = jax.random.normal(k2, (so, si + h), dtype=jnp.float32) / jnp.sqrt(si + h)
    ws_b = jax.random.normal(k3, (so,), dtype=jnp.float32) * 0.1
    wv_w = jax.random.normal(k4, (vo, h), dtype=jnp.float32) / jnp.sqrt(h)
    wsv_w = jax.random.normal(k5, (vo, so), dtype=jnp.float32) / jnp.sqrt(so)
    wsv_b = jax.random.normal(k6, (vo,), dtype=jnp.float32) * 0.1

    s_out, v_out = gvp_forward(s, v, wh_w, ws_w, ws_b, wv_w, wsv_w, wsv_b)
    jax.block_until_ready((s_out, v_out))
    assert s_out.shape == (N, so) and v_out.shape == (N, vo, 3)

    # Tolerance tightened 1e-2 -> 5e-3.  The kernel's f32 matmuls use the MXU's
    # default f32 path (full-f32 multi-pass or bf16-pass depending on the Mosaic
    # default for the generation); XLA's reference dot likewise has two standard
    # f32 precisions.  Require a tight match against the reference at whichever
    # precision corresponds, so the check is strict but not precision-path flaky.
    ref_hi = _reference(s, v, wh_w, ws_w, ws_b, wv_w, wsv_w, wsv_b,
                        precision="highest")
    ref_lo = _reference(s, v, wh_w, ws_w, ws_b, wv_w, wsv_w, wsv_b,
                        precision=None)

    def _close(a, b):
        return bool(jnp.allclose(a, b, atol=5e-3, rtol=5e-3))

    ok_hi = _close(s_out, ref_hi[0]) and _close(v_out, ref_hi[1])
    ok_lo = _close(s_out, ref_lo[0]) and _close(v_out, ref_lo[1])
    assert ok_hi or ok_lo

    print("KERNEL_OK")
</pallas_src>

<mosaic_0001>
module attributes {stable_mosaic.version = 11 : i64} {
  func.func @_gvp_kernel(%arg0: i32, %arg1: memref<16x32xf32, #tpu.memory_space<vmem>>, %arg2: memref<16x24xf32, #tpu.memory_space<vmem>>, %arg3: memref<24x48xf32, #tpu.memory_space<vmem>>, %arg4: memref<32x32xf32, #tpu.memory_space<vmem>>, %arg5: memref<16x32xf32, #tpu.memory_space<vmem>>, %arg6: memref<1x32xf32, #tpu.memory_space<vmem>>, %arg7: memref<48x24xf32, #tpu.memory_space<vmem>>, %arg8: memref<48x16xf32, #tpu.memory_space<vmem>>, %arg9: memref<32x24xf32, #tpu.memory_space<vmem>>, %arg10: memref<1x24xf32, #tpu.memory_space<vmem>>, %arg11: memref<16x32xf32, #tpu.memory_space<vmem>>, %arg12: memref<16x24xf32, #tpu.memory_space<vmem>>) attributes {dimension_semantics = [#tpu.dimension_semantics<parallel>], iteration_bounds = array<i64: 2>, scalar_prefetch = 0 : i64, scratch_operands = 0 : i64, tpu.core_type = #tpu.core_type<tc>, window_params = [{transform_indices = @transform_0, window_bounds = array<i64: 16, 32>}, {transform_indices = @transform_1, window_bounds = array<i64: 16, 24>}, {pipeline_mode = #tpu.pipeline_mode<synchronous>, transform_indices = @transform_2, window_bounds = array<i64: 24, 48>}, {pipeline_mode = #tpu.pipeline_mode<synchronous>, transform_indices = @transform_3, window_bounds = array<i64: 32, 32>}, {pipeline_mode = #tpu.pipeline_mode<synchronous>, transform_indices = @transform_4, window_bounds = array<i64: 16, 32>}, {pipeline_mode = #tpu.pipeline_mode<synchronous>, transform_indices = @transform_5, window_bounds = array<i64: 1, 32>}, {pipeline_mode = #tpu.pipeline_mode<synchronous>, transform_indices = @transform_6, window_bounds = array<i64: 48, 24>}, {pipeline_mode = #tpu.pipeline_mode<synchronous>, transform_indices = @transform_7, window_bounds = array<i64: 48, 16>}, {pipeline_mode = #tpu.pipeline_mode<synchronous>, transform_indices = @transform_8, window_bounds = array<i64: 32, 24>}, {pipeline_mode = #tpu.pipeline_mode<synchronous>, transform_indices = @transform_9, window_bounds = array<i64: 1, 24>}, {transform_indices = @transform_10, window_bounds = array<i64: 16, 32>}, {transform_indices = @transform_11, window_bounds = array<i64: 16, 24>}]} {
    %c0 = arith.constant 0 : index
    %c0_0 = arith.constant 0 : index
    %0 = vector.load %arg1[%c0, %c0_0] : memref<16x32xf32, #tpu.memory_space<vmem>>, vector<16x32xf32>
    %c0_1 = arith.constant 0 : index
    %c0_2 = arith.constant 0 : index
    %1 = vector.load %arg2[%c0_1, %c0_2] : memref<16x24xf32, #tpu.memory_space<vmem>>, vector<16x24xf32>
    %c0_3 = arith.constant 0 : index
    %c0_4 = arith.constant 0 : index
    %2 = vector.load %arg3[%c0_3, %c0_4] : memref<24x48xf32, #tpu.memory_space<vmem>>, vector<24x48xf32>
    %cst = arith.constant dense<0.000000e+00> : vector<16x48xf32>
    %3 = tpu.matmul %1, %2, %cst {dimension_numbers = #tpu.dot_dimension_numbers<[1], [0], [0], [1], [0, 0, 1, 1], [], []>} : vector<16x24xf32>, vector<24x48xf32>, vector<16x48xf32> -> vector<16x48xf32>
    %4 = arith.mulf %3, %3 : vector<16x48xf32>
    %c0_5 = arith.constant 0 : index
    %c0_6 = arith.constant 0 : index
    %5 = vector.load %arg8[%c0_5, %c0_6] : memref<48x16xf32, #tpu.memory_space<vmem>>, vector<48x16xf32>
    %cst_7 = arith.constant dense<0.000000e+00> : vector<16x16xf32>
    %6 = tpu.matmul %4, %5, %cst_7 {dimension_numbers = #tpu.dot_dimension_numbers<[1], [0], [0], [1], [0, 0, 1, 1], [], []>} : vector<16x48xf32>, vector<48x16xf32>, vector<16x16xf32> -> vector<16x16xf32>
    %cst_8 = arith.constant 9.99999993E-9 : f32
    %7 = vector.broadcast %cst_8 : f32 to vector<16x16xf32>
    %8 = arith.maximumf %6, %7 : vector<16x16xf32>
    %9 = math.sqrt %8 : vector<16x16xf32>
    %c0_9 = arith.constant 0 : index
    %c0_10 = arith.constant 0 : index
    %10 = vector.load %arg4[%c0_9, %c0_10] : memref<32x32xf32, #tpu.memory_space<vmem>>, vector<32x32xf32>
    %cst_11 = arith.constant dense<0.000000e+00> : vector<16x32xf32>
    %11 = tpu.matmul %0, %10, %cst_11 {dimension_numbers = #tpu.dot_dimension_numbers<[1], [0], [0], [1], [0, 0, 1, 1], [], []>} : vector<16x32xf32>, vector<32x32xf32>, vector<16x32xf32> -> vector<16x32xf32>
    %c0_12 = arith.constant 0 : index
    %c0_13 = arith.constant 0 : index
    %12 = vector.load %arg5[%c0_12, %c0_13] : memref<16x32xf32, #tpu.memory_space<vmem>>, vector<16x32xf32>
    %cst_14 = arith.constant dense<0.000000e+00> : vector<16x32xf32>
    %13 = tpu.matmul %9, %12, %cst_14 {dimension_numbers = #tpu.dot_dimension_numbers<[1], [0], [0], [1], [0, 0, 1, 1], [], []>} : vector<16x16xf32>, vector<16x32xf32>, vector<16x32xf32> -> vector<16x32xf32>
    %14 = arith.addf %11, %13 : vector<16x32xf32>
    %c0_15 = arith.constant 0 : index
    %c0_16 = arith.constant 0 : index
    %15 = vector.load %arg6[%c0_15, %c0_16] : memref<1x32xf32, #tpu.memory_space<vmem>>, vector<1x32xf32>
    %16 = vector.broadcast %15 : vector<1x32xf32> to vector<16x32xf32>
    %17 = arith.addf %14, %16 : vector<16x32xf32>
    %18 = arith.negf %17 : vector<16x32xf32>
    %19 = math.exp %18 : vector<16x32xf32>
    %cst_17 = arith.constant 1.000000e+00 : f32
    %20 = vector.broadcast %cst_17 : f32 to vector<16x32xf32>
    %21 = arith.addf %20, %19 : vector<16x32xf32>
    %22 = arith.divf %20, %21 : vector<16x32xf32>
    %c0_18 = arith.constant 0 : index
    %c0_19 = arith.constant 0 : index
    %23 = vector.load %arg9[%c0_18, %c0_19] : memref<32x24xf32, #tpu.memory_space<vmem>>, vector<32x24xf32>
    %cst_20 = arith.constant dense<0.000000e+00> : vector<16x24xf32>
    %24 = tpu.matmul %22, %23, %cst_20 {dimension_numbers = #tpu.dot_dimension_numbers<[1], [0], [0], [1], [0, 0, 1, 1], [], []>} : vector<16x32xf32>, vector<32x24xf32>, vector<16x24xf32> -> vector<16x24xf32>
    %c0_21 = arith.constant 0 : index
    %c0_22 = arith.constant 0 : index
    %25 = vector.load %arg10[%c0_21, %c0_22] : memref<1x24xf32, #tpu.memory_space<vmem>>, vector<1x24xf32>
    %26 = vector.broadcast %25 : vector<1x24xf32> to vector<16x24xf32>
    %27 = arith.addf %24, %26 : vector<16x24xf32>
    %28 = arith.negf %27 : vector<16x24xf32>
    %29 = math.exp %28 : vector<16x24xf32>
    %cst_23 = arith.constant 1.000000e+00 : f32
    %30 = vector.broadcast %cst_23 : f32 to vector<16x24xf32>
    %31 = arith.addf %30, %29 : vector<16x24xf32>
    %32 = arith.divf %30, %31 : vector<16x24xf32>
    %cst_24 = arith.constant 0.000000e+00 : f32
    %33 = vector.broadcast %cst_24 : f32 to vector<16x32xf32>
    %34 = arith.maximumf %17, %33 : vector<16x32xf32>
    %c0_25 = arith.constant 0 : index
    %c0_26 = arith.constant 0 : index
    %35 = vector.load %arg11[%c0_25, %c0_26] : memref<16x32xf32, #tpu.memory_space<vmem>>, vector<16x32xf32>
    tpu.vector_store %arg11[%c0_25, %c0_26], %34 {strides = array<i32>} : memref<16x32xf32, #tpu.memory_space<vmem>>, vector<16x32xf32>,
    %c0_27 = arith.constant 0 : index
    %c0_28 = arith.constant 0 : index
    %36 = vector.load %arg7[%c0_27, %c0_28] : memref<48x24xf32, #tpu.memory_space<vmem>>, vector<48x24xf32>
    %cst_29 = arith.constant dense<0.000000e+00> : vector<16x24xf32>
    %37 = tpu.matmul %3, %36, %cst_29 {dimension_numbers = #tpu.dot_dimension_numbers<[1], [0], [0], [1], [0, 0, 1, 1], [], []>} : vector<16x48xf32>, vector<48x24xf32>, vector<16x24xf32> -> vector<16x24xf32>
    %38 = arith.mulf %37, %32 : vector<16x24xf32>
    %c0_30 = arith.constant 0 : index
    %c0_31 = arith.constant 0 : index
    %39 = vector.load %arg12[%c0_30, %c0_31] : memref<16x24xf32, #tpu.memory_space<vmem>>, vector<16x24xf32>
    tpu.vector_store %arg12[%c0_30, %c0_31], %38 {strides = array<i32>} : memref<16x24xf32, #tpu.memory_space<vmem>>, vector<16x24xf32>,
    return
  }
  func.func @transform_0(%arg0: i32) -> (i32, i32) {
    %c0_i32 = arith.constant 0 : i32
    %c0_i32_0 = arith.constant 0 : i32
    return %arg0, %c0_i32 : i32, i32
  }
  func.func @transform_1(%arg0: i32) -> (i32, i32) {
    %c0_i32 = arith.constant 0 : i32
    %c0_i32_0 = arith.constant 0 : i32
    return %arg0, %c0_i32 : i32, i32
  }
  func.func @transform_2(%arg0: i32) -> (i32, i32) {
    %c0_i32 = arith.constant 0 : i32
    %c0_i32_0 = arith.constant 0 : i32
    %c0_i32_1 = arith.constant 0 : i32
    return %c0_i32, %c0_i32_0 : i32, i32
  }
  func.func @transform_3(%arg0: i32) -> (i32, i32) {
    %c0_i32 = arith.constant 0 : i32
    %c0_i32_0 = arith.constant 0 : i32
    %c0_i32_1 = arith.constant 0 : i32
    return %c0_i32, %c0_i32_0 : i32, i32
  }
  func.func @transform_4(%arg0: i32) -> (i32, i32) {
    %c0_i32 = arith.constant 0 : i32
    %c0_i32_0 = arith.constant 0 : i32
    %c0_i32_1 = arith.constant 0 : i32
    return %c0_i32, %c0_i32_0 : i32, i32
  }
  func.func @transform_5(%arg0: i32) -> (i32, i32) {
    %c0_i32 = arith.constant 0 : i32
    %c0_i32_0 = arith.constant 0 : i32
    %c0_i32_1 = arith.constant 0 : i32
    return %c0_i32, %c0_i32_0 : i32, i32
  }
  func.func @transform_6(%arg0: i32) -> (i32, i32) {
    %c0_i32 = arith.constant 0 : i32
    %c0_i32_0 = arith.constant 0 : i32
    %c0_i32_1 = arith.constant 0 : i32
    return %c0_i32, %c0_i32_0 : i32, i32
  }
  func.func @transform_7(%arg0: i32) -> (i32, i32) {
    %c0_i32 = arith.constant 0 : i32
    %c0_i32_0 = arith.constant 0 : i32
    %c0_i32_1 = arith.constant 0 : i32
    return %c0_i32, %c0_i32_0 : i32, i32
  }
  func.func @transform_8(%arg0: i32) -> (i32, i32) {
    %c0_i32 = arith.constant 0 : i32
    %c0_i32_0 = arith.constant 0 : i32
    %c0_i32_1 = arith.constant 0 : i32
    return %c0_i32, %c0_i32_0 : i32, i32
  }
  func.func @transform_9(%arg0: i32) -> (i32, i32) {
    %c0_i32 = arith.constant 0 : i32
    %c0_i32_0 = arith.constant 0 : i32
    %c0_i32_1 = arith.constant 0 : i32
    return %c0_i32, %c0_i32_0 : i32, i32
  }
  func.func @transform_10(%arg0: i32) -> (i32, i32) {
    %c0_i32 = arith.constant 0 : i32
    %c0_i32_0 = arith.constant 0 : i32
    return %arg0, %c0_i32 : i32, i32
  }
  func.func @transform_11(%arg0: i32) -> (i32, i32) {
    %c0_i32 = arith.constant 0 : i32
    %c0_i32_0 = arith.constant 0 : i32
    return %arg0, %c0_i32 : i32, i32
  }
}

</mosaic_0001>

<llo_original>
// kernel: tpu_custom_call.1
$region0: #{tpu_custom_call.1}
  #allocation0 [shape = 'u32[]', space=smem, size = 0x4, offset = 0x4, fixed_abs, tag = 'smem constant byte address 0x4 - core index']
  #allocation1 [shape = 'u32[72,128]{1,0:T(1,128)}', space=vmem, size = 0x9000, scoped, tag = 'internal scratch']
  %s0 = inlined_call_operand.vmem [shape: f32[20,32], index: 0, kind: input, shape index: {}]
  %s1 = inlined_call_operand.vmem [shape: f32[20,24], index: 1, kind: input, shape index: {}]
  %s2 = inlined_call_operand.vmem [shape: f32[24,48], index: 2, kind: input, shape index: {}]
  %s3 = inlined_call_operand.vmem [shape: f32[32,32], index: 3, kind: input, shape index: {}]
  %s4 = inlined_call_operand.vmem [shape: f32[16,32], index: 4, kind: input, shape index: {}]
  %s5 = inlined_call_operand.vmem [shape: f32[1,32], index: 5, kind: input, shape index: {}]
  %s6 = inlined_call_operand.vmem [shape: f32[48,24], index: 6, kind: input, shape index: {}]
  %s7 = inlined_call_operand.vmem [shape: f32[48,16], index: 7, kind: input, shape index: {}]
  %s8 = inlined_call_operand.vmem [shape: f32[32,24], index: 8, kind: input, shape index: {}]
  %s9 = inlined_call_operand.vmem [shape: f32[1,24], index: 9, kind: input, shape index: {}]
  %s10 = inlined_call_operand.hbm [shape: f32[20,32], index: 10, kind: output, shape index: {0}]
  %s11 = inlined_call_operand.hbm [shape: f32[20,24], index: 11, kind: output, shape index: {1}]
  %12 = xla_tuple %s10, %s11
  %s13 = sld [smem:[#allocation0]]
  $region81: #{tpu_custom_call.1} parent=0
    _
  %s15 = ssub.s32 1, %s13
  %s16 = scalar_select 0, %s15, %s13
  $region1: #{tpu_custom_call.1} parent=0
    #allocation2 [shape = 'u8[16384]{0}', space=vmem, size = 0x4000, scoped, tag = 'output window, operand 0']
    #allocation3 [shape = 's32[2]{0}', space=sflag, size = 0x8, scoped, tag = 'scoped memory for tpu_custom_call.1']
    #allocation4 [shape = 'u8[16384]{0}', space=vmem, size = 0x4000, scoped, tag = 'output window, operand 1']
    #allocation5 [shape = 's32[2]{0}', space=sflag, size = 0x8, scoped, tag = 'scoped memory for tpu_custom_call.1']
    %17 = vsyncpa [#allocation3], 0
    %s18 = scalar_lea.sflag [#allocation3], 1
    %19 = vsyncpa %s18, 0
    %20 = vsyncpa [#allocation5], 0
    %s21 = scalar_lea.sflag [#allocation5], 1
    %22 = vsyncpa %s21, 0
    loop: start=0, step=1, limit=4
    $region2: #{tpu_custom_call.1} parent=1 // loop_pre_header
      _
    $region3: #{tpu_custom_call.1} parent=1 // loop_header
      %s24 = sphi 0, %s28
      %p25 = scmp.ge.s32.totalorder %s24, 4
      %s34 = sphi 0, %s36
      %s37 = sphi 0, %s34
      %s38 = sphi 0, %s37
      %s54 = sphi 0, %s38
      %s60 = sphi 0, %s62
      %s63 = sphi 0, %s60
      %s64 = sphi 0, %s63
      %s80 = sphi 0, %s64
      %s84 = sphi 0, %s84
      %s86 = sphi 0, %s84
      %s87 = sphi 0, %s86
      %s101 = sphi 0, %s87
      %s105 = sphi 0, %s105
      %s107 = sphi 0, %s105
      %s108 = sphi 0, %s107
      %s122 = sphi 0, %s108
      %s126 = sphi 0, %s126
      %s128 = sphi 0, %s126
      %s129 = sphi 0, %s128
      %s143 = sphi 0, %s129
      %s147 = sphi 0, %s147
      %s149 = sphi 0, %s147
      %s150 = sphi 0, %s149
      %s164 = sphi 0, %s150
      %s168 = sphi 0, %s168
      %s170 = sphi 0, %s168
      %s171 = sphi 0, %s170
      %s185 = sphi 0, %s171
      %s189 = sphi 0, %s189
      %s191 = sphi 0, %s189
      %s192 = sphi 0, %s191
      %s206 = sphi 0, %s192
      %s210 = sphi 0, %s210
      %s212 = sphi 0, %s210
      %s213 = sphi 0, %s212
      %s227 = sphi 0, %s213
      %s231 = sphi 0, %s231
      %s233 = sphi 0, %s231
      %s234 = sphi 0, %s233
      %s248 = sphi 0, %s234
      %s254 = sphi 0, %s256
      %s257 = sphi 0, %s254
      %s258 = sphi 0, %s257
      %s274 = sphi 0, %s258
      %s280 = sphi 0, %s282
      %s283 = sphi 0, %s280
      %s284 = sphi 0, %s283
      %s300 = sphi 0, %s284
    $region4: #{tpu_custom_call.1} parent=1 // loop_header_branch
      %27 = sbr.rel (%p25) target = $region8
    $region5: #{tpu_custom_call.1} parent=1 // loop_body
      %s29 = ssub.s32 %s24, 1
      %s30 = ssub.s32 %s24, 2
      %s31 = sadd.s32 %s24, 1
      %s32 = ssub.s32 %s24, %s31
      %p33 = scmp.eq.s32.totalorder %s32, 0
      %s35 = sadd.s32 %s34, 1
      %s36 = scalar_select %p33, %s34, %s35
      %p39 = pneg %p33
      %p40 = scmp.eq.s32.totalorder %s24, 1
      %p41 = por %p39, %p40
      %p42 = scmp.ne.s32.totalorder %s34, %s37
      %p43 = scmp.eq.s32.totalorder %s24, 0
      %p44 = por %p42, %p43
      %p45 = scmp.ne.s32.totalorder %s34, %s37
      %p46 = scmp.eq.s32.totalorder %s29, 1
      %p47 = por %p45, %p46
      %p48 = scmp.ne.s32.totalorder %s37, %s38
      %p49 = scmp.eq.s32.totalorder %s29, 0
      %p50 = por %p48, %p49
      %p51 = scmp.ne.s32.totalorder %s37, %s38
      %p52 = scmp.eq.s32.totalorder %s30, 1
      %p53 = por %p51, %p52
      %p55 = scmp.ne.s32.totalorder %s38, %s54
      %p56 = scmp.eq.s32.totalorder %s30, 0
      %p57 = por %p55, %p56
      %s58 = ssub.s32 %s24, %s31
      %p59 = scmp.eq.s32.totalorder %s58, 0
      %s61 = sadd.s32 %s60, 1
      %s62 = scalar_select %p59, %s60, %s61
      %p65 = pneg %p59
      %p66 = scmp.eq.s32.totalorder %s24, 1
      %p67 = por %p65, %p66
      %p68 = scmp.ne.s32.totalorder %s60, %s63
      %p69 = scmp.eq.s32.totalorder %s24, 0
      %p70 = por %p68, %p69
      %p71 = scmp.ne.s32.totalorder %s60, %s63
      %p72 = scmp.eq.s32.totalorder %s29, 1
      %p73 = por %p71, %p72
      %p74 = scmp.ne.s32.totalorder %s63, %s64
      %p75 = scmp.eq.s32.totalorder %s29, 0
      %p76 = por %p74, %p75
      %p77 = scmp.ne.s32.totalorder %s63, %s64
      %p78 = scmp.eq.s32.totalorder %s30, 1
      %p79 = por %p77, %p78
      %p81 = scmp.ne.s32.totalorder %s64, %s80
      %p82 = scmp.eq.s32.totalorder %s30, 0
      %p83 = por %p81, %p82
      %s85 = sadd.s32 %s84, 1
      %p88 = scmp.eq.s32.totalorder %s24, 1
      %p89 = scmp.ne.s32.totalorder %s84, %s86
      %p90 = scmp.eq.s32.totalorder %s24, 0
      %p91 = por %p89, %p90
      %p92 = scmp.ne.s32.totalorder %s84, %s86
      %p93 = scmp.eq.s32.totalorder %s29, 1
      %p94 = por %p92, %p93
      %p95 = scmp.ne.s32.totalorder %s86, %s87
      %p96 = scmp.eq.s32.totalorder %s29, 0
      %p97 = por %p95, %p96
      %p98 = scmp.ne.s32.totalorder %s86, %s87
      %p99 = scmp.eq.s32.totalorder %s30, 1
      %p100 = por %p98, %p99
      %p102 = scmp.ne.s32.totalorder %s87, %s101
      %p103 = scmp.eq.s32.totalorder %s30, 0
      %p104 = por %p102, %p103
      %s106 = sadd.s32 %s105, 1
      %p109 = scmp.eq.s32.totalorder %s24, 1
      %p110 = scmp.ne.s32.totalorder %s105, %s107
      %p111 = scmp.eq.s32.totalorder %s24, 0
      %p112 = por %p110, %p111
      %p113 = scmp.ne.s32.totalorder %s105, %s107
      %p114 = scmp.eq.s32.totalorder %s29, 1
      %p115 = por %p113, %p114
      %p116 = scmp.ne.s32.totalorder %s107, %s108
      %p117 = scmp.eq.s32.totalorder %s29, 0
      %p118 = por %p116, %p117
      %p119 = scmp.ne.s32.totalorder %s107, %s108
      %p120 = scmp.eq.s32.totalorder %s30, 1
      %p121 = por %p119, %p120
      %p123 = scmp.ne.s32.totalorder %s108, %s122
      %p124 = scmp.eq.s32.totalorder %s30, 0
      %p125 = por %p123, %p124
      %s127 = sadd.s32 %s126, 1
      %p130 = scmp.eq.s32.totalorder %s24, 1
      %p131 = scmp.ne.s32.totalorder %s126, %s128
      %p132 = scmp.eq.s32.totalorder %s24, 0
      %p133 = por %p131, %p132
      %p134 = scmp.ne.s32.totalorder %s126, %s128
      %p135 = scmp.eq.s32.totalorder %s29, 1
      %p136 = por %p134, %p135
      %p137 = scmp.ne.s32.totalorder %s128, %s129
      %p138 = scmp.eq.s32.totalorder %s29, 0
      %p139 = por %p137, %p138
      %p140 = scmp.ne.s32.totalorder %s128, %s129
      %p141 = scmp.eq.s32.totalorder %s30, 1
      %p142 = por %p140, %p141
      %p144 = scmp.ne.s32.totalorder %s129, %s143
      %p145 = scmp.eq.s32.totalorder %s30, 0
      %p146 = por %p144, %p145
      %s148 = sadd.s32 %s147, 1
      %p151 = scmp.eq.s32.totalorder %s24, 1
      %p152 = scmp.ne.s32.totalorder %s147, %s149
      %p153 = scmp.eq.s32.totalorder %s24, 0
      %p154 = por %p152, %p153
      %p155 = scmp.ne.s32.totalorder %s147, %s149
      %p156 = scmp.eq.s32.totalorder %s29, 1
      %p157 = por %p155, %p156
      %p158 = scmp.ne.s32.totalorder %s149, %s150
      %p159 = scmp.eq.s32.totalorder %s29, 0
      %p160 = por %p158, %p159
      %p161 = scmp.ne.s32.totalorder %s149, %s150
      %p162 = scmp.eq.s32.totalorder %s30, 1
      %p163 = por %p161, %p162
      %p165 = scmp.ne.s32.totalorder %s150, %s164
      %p166 = scmp.eq.s32.totalorder %s30, 0
      %p167 = por %p165, %p166
      %s169 = sadd.s32 %s168, 1
      %p172 = scmp.eq.s32.totalorder %s24, 1
      %p173 = scmp.ne.s32.totalorder %s168, %s170
      %p174 = scmp.eq.s32.totalorder %s24, 0
      %p175 = por %p173, %p174
      %p176 = scmp.ne.s32.totalorder %s168, %s170
      %p177 = scmp.eq.s32.totalorder %s29, 1
      %p178 = por %p176, %p177
      %p179 = scmp.ne.s32.totalorder %s170, %s171
      %p180 = scmp.eq.s32.totalorder %s29, 0
      %p181 = por %p179, %p180
      %p182 = scmp.ne.s32.totalorder %s170, %s171
      %p183 = scmp.eq.s32.totalorder %s30, 1
      %p184 = por %p182, %p183
      %p186 = scmp.ne.s32.totalorder %s171, %s185
      %p187 = scmp.eq.s32.totalorder %s30, 0
      %p188 = por %p186, %p187
      %s190 = sadd.s32 %s189, 1
      %p193 = scmp.eq.s32.totalorder %s24, 1
      %p194 = scmp.ne.s32.totalorder %s189, %s191
      %p195 = scmp.eq.s32.totalorder %s24, 0
      %p196 = por %p194, %p195
      %p197 = scmp.ne.s32.totalorder %s189, %s191
      %p198 = scmp.eq.s32.totalorder %s29, 1
      %p199 = por %p197, %p198
      %p200 = scmp.ne.s32.totalorder %s191, %s192
      %p201 = scmp.eq.s32.totalorder %s29, 0
      %p202 = por %p200, %p201
      %p203 = scmp.ne.s32.totalorder %s191, %s192
      %p204 = scmp.eq.s32.totalorder %s30, 1
      %p205 = por %p203, %p204
      %p207 = scmp.ne.s32.totalorder %s192, %s206
      %p208 = scmp.eq.s32.totalorder %s30, 0
      %p209 = por %p207, %p208
      %s211 = sadd.s32 %s210, 1
      %p214 = scmp.eq.s32.totalorder %s24, 1
      %p215 = scmp.ne.s32.totalorder %s210, %s212
      %p216 = scmp.eq.s32.totalorder %s24, 0
      %p217 = por %p215, %p216
      %p218 = scmp.ne.s32.totalorder %s210, %s212
      %p219 = scmp.eq.s32.totalorder %s29, 1
      %p220 = por %p218, %p219
      %p221 = scmp.ne.s32.totalorder %s212, %s213
      %p222 = scmp.eq.s32.totalorder %s29, 0
      %p223 = por %p221, %p222
      %p224 = scmp.ne.s32.totalorder %s212, %s213
      %p225 = scmp.eq.s32.totalorder %s30, 1
      %p226 = por %p224, %p225
      %p228 = scmp.ne.s32.totalorder %s213, %s227
      %p229 = scmp.eq.s32.totalorder %s30, 0
      %p230 = por %p228, %p229
      %s232 = sadd.s32 %s231, 1
      %p235 = scmp.eq.s32.totalorder %s24, 1
      %p236 = scmp.ne.s32.totalorder %s231, %s233
      %p237 = scmp.eq.s32.totalorder %s24, 0
      %p238 = por %p236, %p237
      %p239 = scmp.ne.s32.totalorder %s231, %s233
      %p240 = scmp.eq.s32.totalorder %s29, 1
      %p241 = por %p239, %p240
      %p242 = scmp.ne.s32.totalorder %s233, %s234
      %p243 = scmp.eq.s32.totalorder %s29, 0
      %p244 = por %p242, %p243
      %p245 = scmp.ne.s32.totalorder %s233, %s234
      %p246 = scmp.eq.s32.totalorder %s30, 1
      %p247 = por %p245, %p246
      %p249 = scmp.ne.s32.totalorder %s234, %s248
      %p250 = scmp.eq.s32.totalorder %s30, 0
      %p251 = por %p249, %p250
      %s252 = ssub.s32 %s24, %s31
      %p253 = scmp.eq.s32.totalorder %s252, 0
      %s255 = sadd.s32 %s254, 1
      %s256 = scalar_select %p253, %s254, %s255
      %p259 = pneg %p253
      %p260 = scmp.eq.s32.totalorder %s24, 1
      %p261 = por %p259, %p260
      %p262 = scmp.ne.s32.totalorder %s254, %s257
      %p263 = scmp.eq.s32.totalorder %s24, 0
      %p264 = por %p262, %p263
      %p265 = scmp.ne.s32.totalorder %s254, %s257
      %p266 = scmp.eq.s32.totalorder %s29, 1
      %p267 = por %p265, %p266
      %p268 = scmp.ne.s32.totalorder %s257, %s258
      %p269 = scmp.eq.s32.totalorder %s29, 0
      %p270 = por %p268, %p269
      %p271 = scmp.ne.s32.totalorder %s257, %s258
      %p272 = scmp.eq.s32.totalorder %s30, 1
      %p273 = por %p271, %p272
      %p275 = scmp.ne.s32.totalorder %s258, %s274
      %p276 = scmp.eq.s32.totalorder %s30, 0
      %p277 = por %p275, %p276
      %s278 = ssub.s32 %s24, %s31
      %p279 = scmp.eq.s32.totalorder %s278, 0
      %s281 = sadd.s32 %s280, 1
      %s282 = scalar_select %p279, %s280, %s281
      %p285 = pneg %p279
      %p286 = scmp.eq.s32.totalorder %s24, 1
      %p287 = por %p285, %p286
      %p288 = scmp.ne.s32.totalorder %s280, %s283
      %p289 = scmp.eq.s32.totalorder %s24, 0
      %p290 = por %p288, %p289
      %p291 = scmp.ne.s32.totalorder %s280, %s283
      %p292 = scmp.eq.s32.totalorder %s29, 1
      %p293 = por %p291, %p292
      %p294 = scmp.ne.s32.totalorder %s283, %s284
      %p295 = scmp.eq.s32.totalorder %s29, 0
      %p296 = por %p294, %p295
      %p297 = scmp.ne.s32.totalorder %s283, %s284
      %p298 = scmp.eq.s32.totalorder %s30, 1
      %p299 = por %p297, %p298
      %p301 = scmp.ne.s32.totalorder %s284, %s300
      %p302 = scmp.eq.s32.totalorder %s30, 0
      %p303 = por %p301, %p302
      %p304 = scmp.le.s32.totalorder 1, %s24
      %p305 = scmp.lt.s32.totalorder %s24, 3
      %p306 = pnand %p304, %p305
      %p307 = pneg %p306
      // Predicated region
      $region9: #{tpu_custom_call.1} parent=5 // pred_check
        _
      $region10: #{tpu_custom_call.1} parent=5 // pred_check_branch
        %309 = sbr.rel (%p306) target = $region12
      $region11: #{tpu_custom_call.1} parent=5 // pred_region
        %s310 = ssub.s32 %s24, 1
        // Predicated region
        $region13: #{tpu_custom_call.1} parent=11 // pred_check
          %p311 = pneg %p97
        $region14: #{tpu_custom_call.1} parent=11 // pred_check_branch
          %313 = sbr.rel (%p311) target = $region16
        $region15: #{tpu_custom_call.1} parent=11 // pred_region
          _
        $region16: #{tpu_custom_call.1} parent=11 // pred_fallthru
          _
        // Predicated region
        $region17: #{tpu_custom_call.1} parent=11 // pred_check
          %p314 = pneg %p118
        $region18: #{tpu_custom_call.1} parent=11 // pred_check_branch
          %316 = sbr.rel (%p314) target = $region20
        $region19: #{tpu_custom_call.1} parent=11 // pred_region
          _
        $region20: #{tpu_custom_call.1} parent=11 // pred_fallthru
          _
        // Predicated region
        $region21: #{tpu_custom_call.1} parent=11 // pred_check
          %p317 = pneg %p139
        $region22: #{tpu_custom_call.1} parent=11 // pred_check_branch
          %319 = sbr.rel (%p317) target = $region24
        $region23: #{tpu_custom_call.1} parent=11 // pred_region
          _
        $region24: #{tpu_custom_call.1} parent=11 // pred_fallthru
          _
        // Predicated region
        $region25: #{tpu_custom_call.1} parent=11 // pred_check
          %p320 = pneg %p160
        $region26: #{tpu_custom_call.1} parent=11 // pred_check_branch
          %322 = sbr.rel (%p320) target = $region28
        $region27: #{tpu_custom_call.1} parent=11 // pred_region
          _
        $region28: #{tpu_custom_call.1} parent=11 // pred_fallthru
          _
        // Predicated region
        $region29: #{tpu_custom_call.1} parent=11 // pred_check
          %p323 = pneg %p181
        $region30: #{tpu_custom_call.1} parent=11 // pred_check_branch
          %325 = sbr.rel (%p323) target = $region32
        $region31: #{tpu_custom_call.1} parent=11 // pred_region
          _
        $region32: #{tpu_custom_call.1} parent=11 // pred_fallthru
          _
        // Predicated region
        $region33: #{tpu_custom_call.1} parent=11 // pred_check
          %p326 = pneg %p202
        $region34: #{tpu_custom_call.1} parent=11 // pred_check_branch
          %328 = sbr.rel (%p326) target = $region36
        $region35: #{tpu_custom_call.1} parent=11 // pred_region
          _
        $region36: #{tpu_custom_call.1} parent=11 // pred_fallthru
          _
        // Predicated region
        $region37: #{tpu_custom_call.1} parent=11 // pred_check
          %p329 = pneg %p223
        $region38: #{tpu_custom_call.1} parent=11 // pred_check_branch
          %331 = sbr.rel (%p329) target = $region40
        $region39: #{tpu_custom_call.1} parent=11 // pred_region
          _
        $region40: #{tpu_custom_call.1} parent=11 // pred_fallthru
          _
        // Predicated region
        $region41: #{tpu_custom_call.1} parent=11 // pred_check
          %p332 = pneg %p244
        $region42: #{tpu_custom_call.1} parent=11 // pred_check_branch
          %334 = sbr.rel (%p332) target = $region44
        $region43: #{tpu_custom_call.1} parent=11 // pred_region
          _
        $region44: #{tpu_custom_call.1} parent=11 // pred_fallthru
          _
      $region12: #{tpu_custom_call.1} parent=5 // pred_fallthru
        _
      %p335 = scmp.lt.s32.totalorder %s24, 2
      // Predicated region
      $region45: #{tpu_custom_call.1} parent=5 // pred_check
        %p336 = pneg %p335
      $region46: #{tpu_custom_call.1} parent=5 // pred_check_branch
        %338 = sbr.rel (%p336) target = $region48
      $region47: #{tpu_custom_call.1} parent=5 // pred_region
        // Predicated region
        $region49: #{tpu_custom_call.1} parent=47 // pred_check
          %p339 = pneg %p44
        $region50: #{tpu_custom_call.1} parent=47 // pred_check_branch
          %341 = sbr.rel (%p339) target = $region52
        $region51: #{tpu_custom_call.1} parent=47 // pred_region
          %s342 = smul.u32 2, %s24
          %s343 = ssub.s32 3, %s342
          %p344 = scmp.lt.s32.totalorder %s343, 2
          %s345 = scalar_select %p344, %s343, 2
          %s346 = smul.u32 8, %s345
          %p347 = scmp.lt.s32.totalorder %s342, 2
          %s348 = scalar_select %p347, %s342, 2
          %s349 = smul.addr %s348, 8
          %s350 = scalar_lea.vmem %s0, %s349
          %s351 = smul.u32 2, %s24
          %s352 = ssub.s32 3, %s351
          %p353 = scmp.lt.s32.totalorder %s352, 2
          %s354 = scalar_select %p353, %s352, 2
          %s355 = smul.u32 8, %s354
        $region52: #{tpu_custom_call.1} parent=47 // pred_fallthru
          _
        // Predicated region
        $region53: #{tpu_custom_call.1} parent=47 // pred_check
          %p356 = pneg %p70
        $region54: #{tpu_custom_call.1} parent=47 // pred_check_branch
          %358 = sbr.rel (%p356) target = $region56
        $region55: #{tpu_custom_call.1} parent=47 // pred_region
          %s359 = smul.u32 2, %s24
          %s360 = ssub.s32 3, %s359
          %p361 = scmp.lt.s32.totalorder %s360, 2
          %s362 = scalar_select %p361, %s360, 2
          %s363 = smul.u32 8, %s362
          %p364 = scmp.lt.s32.totalorder %s359, 2
          %s365 = scalar_select %p364, %s359, 2
          %s366 = smul.addr %s365, 8
          %s367 = scalar_lea.vmem %s1, %s366
          %s368 = smul.u32 2, %s24
          %s369 = ssub.s32 3, %s368
          %p370 = scmp.lt.s32.totalorder %s369, 2
          %s371 = scalar_select %p370, %s369, 2
          %s372 = smul.u32 8, %s371
        $region56: #{tpu_custom_call.1} parent=47 // pred_fallthru
          _
      $region48: #{tpu_custom_call.1} parent=5 // pred_fallthru
        _
      %p373 = scmp.le.s32.totalorder 1, %s24
      %p374 = scmp.lt.s32.totalorder %s24, 3
      %p375 = pnand %p373, %p374
      %p376 = pneg %p375
      // Predicated region
      $region57: #{tpu_custom_call.1} parent=5 // pred_check
        _
      $region58: #{tpu_custom_call.1} parent=5 // pred_check_branch
        %378 = sbr.rel (%p375) target = $region60
      $region59: #{tpu_custom_call.1} parent=5 // pred_region
        %s379 = ssub.s32 %s24, 1
        %s380 = smul.u32 2, %s29
        %s381 = ssub.s32 3, %s380
        %p382 = scmp.lt.s32.totalorder %s381, 2
        %s383 = scalar_select %p382, %s381, 2
        %s384 = smul.u32 8, %s383
        %p385 = scmp.lt.s32.totalorder %s380, 2
        %s386 = scalar_select %p385, %s380, 2
        %s387 = smul.addr %s386, 8
        %s388 = scalar_lea.vmem %s0, %s387
        %p389 = pneg %p50
        %p390 = pneg %p47
        %s391 = smul.u32 2, %s29
        %s392 = ssub.s32 3, %s391
        %p393 = scmp.lt.s32.totalorder %s392, 2
        %s394 = scalar_select %p393, %s392, 2
        %s395 = smul.u32 8, %s394
        %p396 = scmp.lt.s32.totalorder %s391, 2
        %s397 = scalar_select %p396, %s391, 2
        %s398 = smul.addr %s397, 8
        %s399 = scalar_lea.vmem %s1, %s398
        %p400 = pneg %p76
        %p401 = pneg %p73
        %p402 = pneg %p97
        %p403 = pneg %p94
        %p404 = pneg %p118
        %p405 = pneg %p115
        %p406 = pneg %p139
        %p407 = pneg %p136
        %p408 = pneg %p160
        %p409 = pneg %p157
        %p410 = pneg %p181
        %p411 = pneg %p178
        %p412 = pneg %p202
        %p413 = pneg %p199
        %p414 = pneg %p223
        %p415 = pneg %p220
        %p416 = pneg %p244
        %p417 = pneg %p241
        %p418 = pneg %p270
        %p419 = pneg %p267
        %s420 = sand.u32 %s257, 1
        %s421 = scalar_lea.sflag [#allocation3], %s420
        %s422 = sand.u32 %s257, 1
        %s423 = smul.addr %s422, 16
        %s424 = scalar_lea.vmem [#allocation2], %s423
        %p425 = pneg %p296
        %p426 = pneg %p293
        %s427 = sand.u32 %s283, 1
        %s428 = scalar_lea.sflag [#allocation5], %s427
        %s429 = sand.u32 %s283, 1
        %s430 = smul.addr %s429, 16
        %s431 = scalar_lea.vmem [#allocation4], %s430
        %s432 = smul.u32 2, %s29
        %s433 = ssub.s32 3, %s432
        %p434 = scmp.lt.s32.totalorder %s433, 2
        %s435 = scalar_select %p434, %s433, 2
        %s436 = smul.u32 8, %s435
        %p437 = scmp.lt.s32.totalorder %s432, 2
        %s438 = scalar_select %p437, %s432, 2
        %s439 = smul.addr %s438, 8
        %s440 = scalar_lea.vmem %s0, %s439
        %s441 = smul.u32 2, %s29
        %s442 = ssub.s32 3, %s441
        %p443 = scmp.lt.s32.totalorder %s442, 2
        %s444 = scalar_select %p443, %s442, 2
        %s445 = smul.u32 8, %s444
        %s446 = smul.u32 2, %s29
        %s447 = ssub.s32 3, %s446
        %p448 = scmp.lt.s32.totalorder %s447, 2
        %s449 = scalar_select %p448, %s447, 2
        %s450 = smul.u32 8, %s449
        %p451 = scmp.lt.s32.totalorder %s446, 2
        %s452 = scalar_select %p451, %s446, 2
        %s453 = smul.addr %s452, 8
        %s454 = scalar_lea.vmem %s1, %s453
        %s455 = smul.u32 2, %s29
        %s456 = ssub.s32 3, %s455
        %p457 = scmp.lt.s32.totalorder %s456, 2
        %s458 = scalar_select %p457, %s456, 2
        %s459 = smul.u32 8, %s458
        %s460 = smul.u32 2, %s29
        %s461 = ssub.s32 3, %s460
        %p462 = scmp.lt.s32.totalorder %s461, 2
        %s463 = scalar_select %p462, %s461, 2
        %s464 = smul.u32 8, %s463
        %s465 = smul.u32 2, %s29
        %s466 = ssub.s32 3, %s465
        %p467 = scmp.lt.s32.totalorder %s466, 2
        %s468 = scalar_select %p467, %s466, 2
        %s469 = smul.u32 8, %s468
        %v470 = vld [vmem:[%s440] sm:$0xff]
        %v471 = vld [vmem:[%s440 + $0x8] sm:$0xff]
        %v472 = vld [vmem:[%s454] sm:$0xff]
        %v473 = vld [vmem:[%s454 + $0x8] sm:$0xff]
        %v474 = vld [vmem:[%s2] sm:$0xff]
        %v475 = vld [vmem:[%s2 + $0x8] sm:$0xff]
        %v476 = vld [vmem:[%s2 + $0x10] sm:$0xff]
        %vm477 = vcmask 195584
        %v479 = vsel %vm477, %v472, 0
        %v482 = vsel %vm477, %v473, 0
        %484 = vmatpush.msra.mxu0 0.0
        %485 = vmatpush.msra.mxu0 0.0
        %486 = vmatpush.msra.mxu0 0.0
        %487 = vmatpush.msra.mxu0 0.0
        %488 = vmatpush.msra.mxu0 0.0
        %489 = vmatpush.msra.mxu0 0.0
        %490 = vmatpush.msra.mxu0 0.0
        %491 = vmatpush.msra.mxu0 0.0
        %492 = vmatpush.msra.mxu0 0.0
        %493 = vmatpush.msra.mxu0 0.0
        %494 = vmatpush.msra.mxu0 0.0
        %495 = vmatpush.msra.mxu0 0.0
        %496 = vmatpush.msra.mxu0 0.0
        %497 = vmatpush.msra.mxu0 %v476
        %498 = vmatpush.msra.mxu0 %v475
        %499 = vmatpush.msra.mxu0 %v474
        %500 = vmatmul.f32.gmra.mxu0 %v479
        %v501 = vpop.f32.mrf.mxu0
        %v502 = vadd.f32 0.0, %v501
        %503 = vmatmul.f32.gmra.mxu0 %v482
        %v504 = vpop.f32.mrf.mxu0
        %v505 = vadd.f32 0.0, %v504
        %506 = vdwg.mxu0
        %v507 = vmul.f32 %v502, %v502
        %v508 = vmul.f32 %v505, %v505
        %v509 = vld [vmem:[%s7] sm:$0xff]
        %v510 = vld [vmem:[%s7 + $0x8] sm:$0xff]
        %v511 = vld [vmem:[%s7 + $0x10] sm:$0xff]
        %v512 = vld [vmem:[%s7 + $0x18] sm:$0xff]
        %v513 = vld [vmem:[%s7 + $0x20] sm:$0xff]
        %v514 = vld [vmem:[%s7 + $0x28] sm:$0xff]
        %vm515 = vcmask 392192
        %v517 = vsel %vm515, %v507, 0
        %v520 = vsel %vm515, %v508, 0
        %522 = vmatpush.msra.mxu0 0.0
        %523 = vmatpush.msra.mxu0 0.0
        %524 = vmatpush.msra.mxu0 0.0
        %525 = vmatpush.msra.mxu0 0.0
        %526 = vmatpush.msra.mxu0 0.0
        %527 = vmatpush.msra.mxu0 0.0
        %528 = vmatpush.msra.mxu0 0.0
        %529 = vmatpush.msra.mxu0 0.0
        %530 = vmatpush.msra.mxu0 0.0
        %531 = vmatpush.msra.mxu0 0.0
        %532 = vmatpush.msra.mxu0 %v514
        %533 = vmatpush.msra.mxu0 %v513
        %534 = vmatpush.msra.mxu0 %v512
        %535 = vmatpush.msra.mxu0 %v511
        %536 = vmatpush.msra.mxu0 %v510
        %537 = vmatpush.msra.mxu0 %v509
        %538 = vmatmul.f32.gmra.mxu0 %v517
        %v539 = vpop.f32.mrf.mxu0
        %v540 = vadd.f32 0.0, %v539
        %541 = vmatmul.f32.gmra.mxu0 %v520
        %v542 = vpop.f32.mrf.mxu0
        %v543 = vadd.f32 0.0, %v542
        %544 = vdwg.mxu0
        %v545 = vmax.f32 %v540, 1e-08
        %v546 = vmax.f32 %v543, 1e-08
        %v547 = vrsqrt.pop %v545
        %v548 = vmul.f32 %v547, %v545
        %v549 = vmul.f32 %v548, %v547
        %v550 = vmul.f32 0.5, %v549
        %v551 = vsub.f32 1.5, %v550
        %v552 = vmul.f32 %v547, %v551
        %v553 = vmul.f32 %v545, %v552
        %vm554 = vcmp.eq.f32.partialorder %v545, inf
        %v555 = vsel %vm554, %v545, %v553
        %vm556 = vcmp.eq.f32.partialorder %v545, 0.0
        %v557 = vand.u32 %v545, 2147483648
        %v558 = vsel %vm556, %v557, %v555
        %v559 = vrsqrt.pop %v546
        %v560 = vmul.f32 %v559, %v546
        %v561 = vmul.f32 %v560, %v559
        %v562 = vmul.f32 0.5, %v561
        %v563 = vsub.f32 1.5, %v562
        %v564 = vmul.f32 %v559, %v563
        %v565 = vmul.f32 %v546, %v564
        %vm566 = vcmp.eq.f32.partialorder %v546, inf
        %v567 = vsel %vm566, %v546, %v565
        %vm568 = vcmp.eq.f32.partialorder %v546, 0.0
        %v569 = vand.u32 %v546, 2147483648
        %v570 = vsel %vm568, %v569, %v567
        %v571 = vld [vmem:[%s3] sm:$0xff]
        %v572 = vld [vmem:[%s3 + $0x8] sm:$0xff]
        %v573 = vld [vmem:[%s3 + $0x10] sm:$0xff]
        %v574 = vld [vmem:[%s3 + $0x18] sm:$0xff]
        %v575 = vld [vmem:[%s4] sm:$0xff]
        %v576 = vld [vmem:[%s4 + $0x8] sm:$0xff]
        %vm577 = vcmask 130048
        %v579 = vsel %vm577, %v558, 0
        %v582 = vsel %vm577, %v570, 0
        %584 = vmatpush.msra.mxu0 0.0
        %585 = vmatpush.msra.mxu0 0.0
        %586 = vmatpush.msra.mxu0 0.0
        %587 = vmatpush.msra.mxu0 0.0
        %588 = vmatpush.msra.mxu0 0.0
        %589 = vmatpush.msra.mxu0 0.0
        %590 = vmatpush.msra.mxu0 0.0
        %591 = vmatpush.msra.mxu0 0.0
        %592 = vmatpush.msra.mxu0 0.0
        %593 = vmatpush.msra.mxu0 0.0
        %594 = vmatpush.msra.mxu0 0.0
        %595 = vmatpush.msra.mxu0 0.0
        %596 = vmatpush.msra.mxu0 0.0
        %597 = vmatpush.msra.mxu0 0.0
        %598 = vmatpush.msra.mxu0 %v576
        %599 = vmatpush.msra.mxu0 %v575
        %600 = vmatmul.f32.gmra.mxu0 %v579
        %v601 = vpop.f32.mrf.mxu0
        %v602 = vadd.f32 0.0, %v601
        %603 = vmatmul.f32.gmra.mxu0 %v582
        %v604 = vpop.f32.mrf.mxu0
        %v605 = vadd.f32 0.0, %v604
        %606 = vdwg.mxu0
        %vm607 = vcmask 261120
        %v609 = vsel %vm607, %v470, 0
        %v612 = vsel %vm607, %v471, 0
        %614 = vmatpush.msra.mxu0 0.0
        %615 = vmatpush.msra.mxu0 0.0
        %616 = vmatpush.msra.mxu0 0.0
        %617 = vmatpush.msra.mxu0 0.0
        %618 = vmatpush.msra.mxu0 0.0
        %619 = vmatpush.msra.mxu0 0.0
        %620 = vmatpush.msra.mxu0 0.0
        %621 = vmatpush.msra.mxu0 0.0
        %622 = vmatpush.msra.mxu0 0.0
        %623 = vmatpush.msra.mxu0 0.0
        %624 = vmatpush.msra.mxu0 0.0
        %625 = vmatpush.msra.mxu0 0.0
        %626 = vmatpush.msra.mxu0 %v574
        %627 = vmatpush.msra.mxu0 %v573
        %628 = vmatpush.msra.mxu0 %v572
        %629 = vmatpush.msra.mxu0 %v571
        %630 = vmatmul.f32.gmra.mxu0 %v609
        %v631 = vpop.f32.mrf.mxu0
        %v632 = vadd.f32 %v602, %v631
        %633 = vmatmul.f32.gmra.mxu0 %v612
        %v634 = vpop.f32.mrf.mxu0
        %v635 = vadd.f32 %v605, %v634
        %636 = vdwg.mxu0
        %v637 = vld [vmem:[%s5] sm:$0x1]
        %v639 = vperm.slane %v637, 0
        %v641 = vadd.f32 %v632, %v639
        %v642 = vadd.f32 %v635, %v639
        %v643 = vxor.u32 %v641, 2147483648
        %v644 = vxor.u32 %v642, 2147483648
        %v645 = vmul.f32 %v643, 1.442695
        %v646 = vpow.pop %v645
        %v647 = vmul.f32 %v644, 1.442695
        %v648 = vpow.pop %v647
        %v649 = vadd.f32 %v646, 1.0
        %v650 = vadd.f32 %v648, 1.0
        %v651 = vrcp.pop %v649
        %v652 = vmul.f32 %v649, %v651
        %v653 = vsub.f32 1.0, %v652
        %v654 = vmul.f32 %v651, %v653
        %v655 = vadd.f32 %v651, %v654
        %vm656 = vweird.f32 %v649
        %vm657 = vweird.f32 %v651
        %vm658 = vmor %vm656, %vm657
        %v659 = vsel %vm658, %v651, %v655
        %v660 = vand.u32 2147483647, %v649
        %vm661 = vcmp.eq.f32.partialorder %v660, 8.507059e+37
        %v662 = vand.u32 %v649, 2147483648
        %v663 = vor.u32 1.1754944e-38, %v662
        %v664 = vsel %vm661, %v663, %v659
        %v665 = vmul.f32 1.0, %v664
        %v666 = vrcp.pop %v650
        %v667 = vmul.f32 %v650, %v666
        %v668 = vsub.f32 1.0, %v667
        %v669 = vmul.f32 %v666, %v668
        %v670 = vadd.f32 %v666, %v669
        %vm671 = vweird.f32 %v650
        %vm672 = vweird.f32 %v666
        %vm673 = vmor %vm671, %vm672
        %v674 = vsel %vm673, %v666, %v670
        %v675 = vand.u32 2147483647, %v650
        %vm676 = vcmp.eq.f32.partialorder %v675, 8.507059e+37
        %v677 = vand.u32 %v650, 2147483648
        %v678 = vor.u32 1.1754944e-38, %v677
        %v679 = vsel %vm676, %v678, %v674
        %v680 = vmul.f32 1.0, %v679
        %v681 = vld [vmem:[%s8] sm:$0xff]
        %v682 = vld [vmem:[%s8 + $0x8] sm:$0xff]
        %v683 = vld [vmem:[%s8 + $0x10] sm:$0xff]
        %v684 = vld [vmem:[%s8 + $0x18] sm:$0xff]
        %v685 = vld [vmem:[%s9] sm:$0x1]
        %v687 = vperm.slane %v685, 0
        %v690 = vsel %vm607, %v665, 0
        %v693 = vsel %vm607, %v680, 0
        %695 = vmatpush.msra.mxu0 0.0
        %696 = vmatpush.msra.mxu0 0.0
        %697 = vmatpush.msra.mxu0 0.0
        %698 = vmatpush.msra.mxu0 0.0
        %699 = vmatpush.msra.mxu0 0.0
        %700 = vmatpush.msra.mxu0 0.0
        %701 = vmatpush.msra.mxu0 0.0
        %702 = vmatpush.msra.mxu0 0.0
        %703 = vmatpush.msra.mxu0 0.0
        %704 = vmatpush.msra.mxu0 0.0
        %705 = vmatpush.msra.mxu0 0.0
        %706 = vmatpush.msra.mxu0 0.0
        %707 = vmatpush.msra.mxu0 %v684
        %708 = vmatpush.msra.mxu0 %v683
        %709 = vmatpush.msra.mxu0 %v682
        %710 = vmatpush.msra.mxu0 %v681
        %711 = vmatmul.f32.gmra.mxu0 %v690
        %v712 = vpop.f32.mrf.mxu0
        %v713 = vadd.f32 %v687, %v712
        %714 = vmatmul.f32.gmra.mxu0 %v693
        %v715 = vpop.f32.mrf.mxu0
        %v716 = vadd.f32 %v687, %v715
        %717 = vdwg.mxu0
        %v718 = vxor.u32 %v713, 2147483648
        %v719 = vxor.u32 %v716, 2147483648
        %v720 = vmul.f32 %v718, 1.442695
        %v721 = vpow.pop %v720
        %v722 = vmul.f32 %v719, 1.442695
        %v723 = vpow.pop %v722
        %v724 = vadd.f32 %v721, 1.0
        %v725 = vadd.f32 %v723, 1.0
        %v726 = vrcp.pop %v724
        %v727 = vmul.f32 %v724, %v726
        %v728 = vsub.f32 1.0, %v727
        %v729 = vmul.f32 %v726, %v728
        %v730 = vadd.f32 %v726, %v729
        %vm731 = vweird.f32 %v724
        %vm732 = vweird.f32 %v726
        %vm733 = vmor %vm731, %vm732
        %v734 = vsel %vm733, %v726, %v730
        %v735 = vand.u32 2147483647, %v724
        %vm736 = vcmp.eq.f32.partialorder %v735, 8.507059e+37
        %v737 = vand.u32 %v724, 2147483648
        %v738 = vor.u32 1.1754944e-38, %v737
        %v739 = vsel %vm736, %v738, %v734
        %v740 = vmul.f32 1.0, %v739
        %v741 = vrcp.pop %v725
        %v742 = vmul.f32 %v725, %v741
        %v743 = vsub.f32 1.0, %v742
        %v744 = vmul.f32 %v741, %v743
        %v745 = vadd.f32 %v741, %v744
        %vm746 = vweird.f32 %v725
        %vm747 = vweird.f32 %v741
        %vm748 = vmor %vm746, %vm747
        %v749 = vsel %vm748, %v741, %v745
        %v750 = vand.u32 2147483647, %v725
        %vm751 = vcmp.eq.f32.partialorder %v750, 8.507059e+37
        %v752 = vand.u32 %v725, 2147483648
        %v753 = vor.u32 1.1754944e-38, %v752
        %v754 = vsel %vm751, %v753, %v749
        %v755 = vmul.f32 1.0, %v754
        %v756 = vmax.f32 %v641, 0.0
        %v757 = vmax.f32 %v642, 0.0
        %758 = vst.msk [vmem:[%s424] sm:$0xff] %vm607, %v756
        %759 = vst.msk [vmem:[%s424 + $0x8] sm:$0xff] %vm607, %v757
        %v760 = vld [vmem:[%s6] sm:$0xff]
        %v761 = vld [vmem:[%s6 + $0x8] sm:$0xff]
        %v762 = vld [vmem:[%s6 + $0x10] sm:$0xff]
        %v763 = vld [vmem:[%s6 + $0x18] sm:$0xff]
        %v764 = vld [vmem:[%s6 + $0x20] sm:$0xff]
        %v765 = vld [vmem:[%s6 + $0x28] sm:$0xff]
        %v767 = vsel %vm515, %v502, 0
        %v770 = vsel %vm515, %v505, 0
        %772 = vmatpush.msra.mxu0 0.0
        %773 = vmatpush.msra.mxu0 0.0
        %774 = vmatpush.msra.mxu0 0.0
        %775 = vmatpush.msra.mxu0 0.0
        %776 = vmatpush.msra.mxu0 0.0
        %777 = vmatpush.msra.mxu0 0.0
        %778 = vmatpush.msra.mxu0 0.0
        %779 = vmatpush.msra.mxu0 0.0
        %780 = vmatpush.msra.mxu0 0.0
        %781 = vmatpush.msra.mxu0 0.0
        %782 = vmatpush.msra.mxu0 %v765
        %783 = vmatpush.msra.mxu0 %v764
        %784 = vmatpush.msra.mxu0 %v763
        %785 = vmatpush.msra.mxu0 %v762
        %786 = vmatpush.msra.mxu0 %v761
        %787 = vmatpush.msra.mxu0 %v760
        %788 = vmatmul.f32.gmra.mxu0 %v767
        %v789 = vpop.f32.mrf.mxu0
        %v790 = vadd.f32 0.0, %v789
        %791 = vmatmul.f32.gmra.mxu0 %v770
        %v792 = vpop.f32.mrf.mxu0
        %v793 = vadd.f32 0.0, %v792
        %794 = vdwg.mxu0
        %v795 = vmul.f32 %v790, %v740
        %v796 = vmul.f32 %v793, %v755
        %797 = vst.msk [vmem:[%s431] sm:$0xff] %vm477, %v795
        %798 = vst.msk [vmem:[%s431 + $0x8] sm:$0xff] %vm477, %v796
        %s799 = sand.u32 %s257, 1
        %s800 = scalar_lea.sflag [#allocation3], %s799
        %s801 = sand.u32 %s257, 1
        %s802 = smul.addr %s801, 16
        %s803 = scalar_lea.vmem [#allocation2], %s802
        %s804 = sand.u32 %s283, 1
        %s805 = scalar_lea.sflag [#allocation5], %s804
        %s806 = sand.u32 %s283, 1
        %s807 = smul.addr %s806, 16
        %s808 = scalar_lea.vmem [#allocation4], %s807
        // Predicated region
        $region61: #{tpu_custom_call.1} parent=59 // pred_check
          %p809 = pneg %p267
        $region62: #{tpu_custom_call.1} parent=59 // pred_check_branch
          %811 = sbr.rel (%p809) target = $region64
        $region63: #{tpu_custom_call.1} parent=59 // pred_region
          %s812 = smul.u32 2, %s29
          %s813 = ssub.s32 3, %s812
          %p814 = scmp.lt.s32.totalorder %s813, 2
          %s815 = scalar_select %p814, %s813, 2
          %s816 = smul.u32 8, %s815
          %s817 = ssub.s32 16, %s816
          %s818 = sshll.u32 %s817, 4
          %819 = vsyncadd %s800, %s818
          %p820 = scmp.ne.s32.totalorder 0, %s816
          %s821 = smul.addr %s812, 8
          %s822 = scalar_lea.hbm %s10, %s821
          %s823 = smul.u32 8, %s815
          %s824 = sshll.u32 %s803, 4
          %s825 = int_to_ptr.vmem [resolvable:$true] %s824
          %s826 = sshll.u32 %s822, 4
          %s827 = int_to_ptr.hbm [resolvable:$true] %s826
          %s828 = sshll.u32 %s823, 4
          %832 = dma.vmem_to_hbm [thread:$0]  (%p820), %s825, %s828, %s827, %s800, 128, 128, 8
        $region64: #{tpu_custom_call.1} parent=59 // pred_fallthru
          _
        // Predicated region
        $region65: #{tpu_custom_call.1} parent=59 // pred_check
          %p833 = pneg %p293
        $region66: #{tpu_custom_call.1} parent=59 // pred_check_branch
          %835 = sbr.rel (%p833) target = $region68
        $region67: #{tpu_custom_call.1} parent=59 // pred_region
          %s836 = smul.u32 2, %s29
          %s837 = ssub.s32 3, %s836
          %p838 = scmp.lt.s32.totalorder %s837, 2
          %s839 = scalar_select %p838, %s837, 2
          %s840 = smul.u32 8, %s839
          %s841 = ssub.s32 16, %s840
          %s842 = sshll.u32 %s841, 4
          %843 = vsyncadd %s805, %s842
          %p844 = scmp.ne.s32.totalorder 0, %s840
          %s845 = smul.addr %s836, 8
          %s846 = scalar_lea.hbm %s11, %s845
          %s847 = smul.u32 8, %s839
          %s848 = sshll.u32 %s808, 4
          %s849 = int_to_ptr.vmem [resolvable:$true] %s848
          %s850 = sshll.u32 %s846, 4
          %s851 = int_to_ptr.hbm [resolvable:$true] %s850
          %s852 = sshll.u32 %s847, 4
          %856 = dma.vmem_to_hbm [thread:$0]  (%p844), %s849, %s852, %s851, %s805, 128, 128, 8
        $region68: #{tpu_custom_call.1} parent=59 // pred_fallthru
          _
      $region60: #{tpu_custom_call.1} parent=5 // pred_fallthru
        _
      %p857 = scmp.le.s32.totalorder 2, %s24
      // Predicated region
      $region69: #{tpu_custom_call.1} parent=5 // pred_check
        %p858 = pneg %p857
      $region70: #{tpu_custom_call.1} parent=5 // pred_check_branch
        %860 = sbr.rel (%p858) target = $region72
      $region71: #{tpu_custom_call.1} parent=5 // pred_region
        %s861 = ssub.s32 %s24, 2
        // Predicated region
        $region73: #{tpu_custom_call.1} parent=71 // pred_check
          %p862 = pneg %p273
        $region74: #{tpu_custom_call.1} parent=71 // pred_check_branch
          %864 = sbr.rel (%p862) target = $region76
        $region75: #{tpu_custom_call.1} parent=71 // pred_region
          %s865 = sand.u32 %s258, 1
          %s866 = scalar_lea.sflag [#allocation3], %s865
          %s867 = sand.u32 %s258, 1
          %s868 = smul.addr %s867, 16
          %s869 = scalar_lea.vmem [#allocation2], %s868
          %871 = dma.done %s866, 256
        $region76: #{tpu_custom_call.1} parent=71 // pred_fallthru
          _
        // Predicated region
        $region77: #{tpu_custom_call.1} parent=71 // pred_check
          %p872 = pneg %p299
        $region78: #{tpu_custom_call.1} parent=71 // pred_check_branch
          %874 = sbr.rel (%p872) target = $region80
        $region79: #{tpu_custom_call.1} parent=71 // pred_region
          %s875 = sand.u32 %s284, 1
          %s876 = scalar_lea.sflag [#allocation5], %s875
          %s877 = sand.u32 %s284, 1
          %s878 = smul.addr %s877, 16
          %s879 = scalar_lea.vmem [#allocation4], %s878
          %881 = dma.done %s876, 256
        $region80: #{tpu_custom_call.1} parent=71 // pred_fallthru
          _
      $region72: #{tpu_custom_call.1} parent=5 // pred_fallthru
        _
    $region6: #{tpu_custom_call.1} parent=1 // loop_footer
      %s28 = sadd.s32 1, %s24
    $region7: #{tpu_custom_call.1} parent=1 // loop_footer_branch
      %23 = sbr.rel target = $region3
    $region8: #{tpu_custom_call.1} parent=1 // loop_exit
      _
    %882 = vsyncpa [#allocation3], 1
    %s883 = scalar_lea.sflag [#allocation3], 1
    %884 = vsyncpa %s883, 1
    %885 = vsyncpa [#allocation5], 1
    %s886 = scalar_lea.sflag [#allocation5], 1
    %887 = vsyncpa %s886, 1

</llo_original>
